<compile_context>
chip_gen: v6e
topology: v6e:2x2x1
jax: 0.10.0
libtpu: 0.0.40
codegen_flags: <defaults>
</compile_context>

<pallas_src>
import functools

import jax
import jax.numpy as jnp
from jax.experimental import pallas as pl
from jax.experimental.pallas import tpu as pltpu


# --------------------------------------------------------------------------- #
# Kernel body
# --------------------------------------------------------------------------- #
def _layernorm_kernel(*refs, features, eps, use_scale, use_center):
    # Positional refs: x, [scale], [center], out  (params only present if used)
    x_ref = refs[0]
    idx = 1
    scale_ref = refs[idx] if use_scale else None
    idx += int(use_scale)
    center_ref = refs[idx] if use_center else None
    idx += int(use_center)
    o_ref = refs[idx]

    x = x_ref[...].astype(jnp.float32)                      # (T, F)

    # Fused single-sweep reduction: sum(x) and sum(x*x) together.
    s = jnp.sum(x, axis=-1, keepdims=True)                  # (T, 1)
    sq = jnp.sum(x * x, axis=-1, keepdims=True)             # (T, 1)
    mean = s * jnp.float32(1.0 / features)
    # torch.std default: unbiased estimator (divide by N - 1).
    var = (sq - s * mean) * jnp.float32(1.0 / (features - 1))
    var = jnp.maximum(var, 0.0)                             # guard cancellation
    std = jnp.sqrt(var)

    # Per-row reciprocal (T x 1) then a broadcast multiply; avoids a full
    # (T x F) VPU divide.  (approx=True would push it onto the EUP but changes
    # rounding; exact keeps bit-level agreement with the reference.)
    inv = pl.reciprocal(std + jnp.float32(eps), approx=False)
    out = (x - mean) * inv

    if use_scale:
        out = out * scale_ref[...].astype(jnp.float32)      # (1, F) broadcast
    if use_center:
        out = out + center_ref[...].astype(jnp.float32)     # (1, F) broadcast

    o_ref[...] = out.astype(o_ref.dtype)


# --------------------------------------------------------------------------- #
# Tiling helpers
# --------------------------------------------------------------------------- #
def _vmem_capacity_bytes():
    try:
        cap = getattr(pltpu.get_tpu_info(), "vmem_capacity_bytes", None)
        if cap:
            return int(cap)
    except Exception:
        pass
    return 64 * 1024 * 1024  # conservative fallback (v7x-sized VMEM)


def _round_up(a, b):
    return -(-a // b) * b


def _pick_tiling(rows, features, itemsize):
    """Choose (tile_rows, rows_padded, vmem_limit_bytes)."""
    # Sublane packing: 8 rows for 4-byte, 16 for 2-byte, 32 for 1-byte dtypes.
    sub = max(8, 32 // max(1, itemsize))

    vmem = _vmem_capacity_bytes()
    # Request up to half of physical VMEM (capped), budget ~3/4 of that for the
    # double-buffered pipeline + f32 temporaries.  Automatically smaller on v7x.
    vmem_limit = min(vmem // 2, 64 * 1024 * 1024)
    budget = (vmem_limit * 3) // 4

    # Per-row cost: x + out blocks, double-buffered, in the I/O dtype, plus
    # ~3 f32-sized temporaries (cast, centered, normalized) in the kernel body.
    per_row = 2 * 2 * features * itemsize + 3 * features * 4

    tile = budget // per_row
    tile = min(tile, 1024, _round_up(rows, sub))   # don't over-pad small inputs
    tile = max(sub, (tile // sub) * sub)           # sublane-aligned

    rows_padded = _round_up(rows, tile)
    return tile, rows_padded, vmem_limit


# --------------------------------------------------------------------------- #
# Wrapper
# --------------------------------------------------------------------------- #
def layernorm_pallas(x, scale_param=None, center_param=None, *,
                     center=True, scale=False, eps=1e-6, tile_rows=None):
    """x: (rows, features).  scale_param/center_param: (features,), only
    required (and only DMA'd) when the corresponding flag is True.

    NOTE: for best store bandwidth, `features` should be a multiple of 128
    (lane-dense); other sizes are correct but use masked partial stores.
    """
    rows, features = x.shape
    assert features >= 2, "unbiased std needs features >= 2 (torch yields NaN at 1)"

    itemsize = jnp.dtype(x.dtype).itemsize
    auto_tile, rows_padded, vmem_limit = _pick_tiling(rows, features, itemsize)
    if tile_rows is None:
        tile_rows = auto_tile
        rows_padded = _round_up(rows, tile_rows)
    else:
        rows_padded = _round_up(rows, tile_rows)

    # Zero-pad ragged row counts (rows are independent; padded rows are cheap
    # and finite: mean=0, std=0 -> output 0) and slice the result back.
    x_p = x if rows_padded == rows else jnp.pad(x, ((0, rows_padded - rows), (0, 0)))

    # Conditional operand plumbing: only ship params that are actually used.
    inputs = [x_p]
    in_specs = [pl.BlockSpec((tile_rows, features), lambda i: (i, 0))]
    if scale:
        assert scale_param is not None
        inputs.append(scale_param.reshape(1, features))
        in_specs.append(pl.BlockSpec((1, features), lambda i: (0, 0)))
    if center:
        assert center_param is not None
        inputs.append(center_param.reshape(1, features))
        in_specs.append(pl.BlockSpec((1, features), lambda i: (0, 0)))

    kernel = functools.partial(
        _layernorm_kernel,
        features=features, eps=eps, use_scale=scale, use_center=center)

    grid = (rows_padded // tile_rows,)

    out = pl.pallas_call(
        kernel,
        out_shape=jax.ShapeDtypeStruct((rows_padded, features), x.dtype),
        grid_spec=pltpu.PrefetchScalarGridSpec(
            num_scalar_prefetch=0,
            grid=grid,
            in_specs=in_specs,
            out_specs=pl.BlockSpec((tile_rows, features), lambda i: (i, 0)),
        ),
        compiler_params=pltpu.CompilerParams(
            dimension_semantics=("parallel",),   # lets v7x shard rows over 2 TCs
            vmem_limit_bytes=int(vmem_limit),
        ),
        cost_estimate=pl.CostEstimate(
            flops=7 * rows_padded * features,
            transcendentals=2 * rows_padded,
            bytes_accessed=2 * rows_padded * features * itemsize
                           + (int(scale) + int(center)) * features * 4,
        ),
    )(*inputs)

    return out if rows_padded == rows else out[:rows]


# --------------------------------------------------------------------------- #
# Pure-JAX reference (matches the PyTorch module semantics)
# --------------------------------------------------------------------------- #
def layernorm_reference(x, scale_param=None, center_param=None, *,
                        center=True, scale=False, eps=1e-6):
    xf = x.astype(jnp.float32)
    mean = jnp.mean(xf, axis=-1, keepdims=True)
    var = jnp.sum((xf - mean) ** 2, axis=-1, keepdims=True) / (x.shape[-1] - 1)
    out = (xf - mean) / (jnp.sqrt(var) + eps)
    if scale:
        out = out * scale_param.astype(jnp.float32)
    if center:
        out = out + center_param.astype(jnp.float32)
    return out.astype(x.dtype)


# --------------------------------------------------------------------------- #
# Self-test
# --------------------------------------------------------------------------- #
if __name__ == "__main__":
    key = jax.random.PRNGKey(0)
    k1, k2 = jax.random.split(key)

    # ---- Module-default config (center=True, scale=False), lane-dense F ----
    rows, features = 128, 256            # e.g. batch=4 x seq=32 flattened, hidden=256
    x = jax.random.normal(k1, (rows, features), dtype=jnp.float32)

    # Deterministic parameter init matching nn.Module.__init__:
    scale_param = jnp.ones((features,), dtype=jnp.float32)
    center_param = jnp.zeros((features,), dtype=jnp.float32)

    out = layernorm_pallas(x, center_param=center_param,
                           center=True, scale=False, eps=1e-6)
    out = jax.block_until_ready(out)
    ref = layernorm_reference(x, center_param=center_param,
                              center=True, scale=False, eps=1e-6)
    assert out.shape == x.shape
    assert jnp.allclose(out, ref, atol=1e-5, rtol=1e-5), "mismatch (default cfg)"

    # ---- Ragged rows + scale path (exercises padding & conditional params) ----
    rows2 = 100
    x2 = jax.random.normal(k2, (rows2, features), dtype=jnp.float32) * 2.0 + 0.5
    scale2 = jnp.full((features,), 1.5, dtype=jnp.float32)
    center2 = jnp.full((features,), 0.25, dtype=jnp.float32)
    out2 = jax.block_until_ready(
        layernorm_pallas(x2, scale_param=scale2, center_param=center2,
                         center=True, scale=True, eps=1e-6))
    ref2 = layernorm_reference(x2, scale_param=scale2, center_param=center2,
                               center=True, scale=True, eps=1e-6)
    assert out2.shape == x2.shape
    assert jnp.allclose(out2, ref2, atol=1e-5, rtol=1e-5), "mismatch (ragged/scale)"

    print("KERNEL_OK")
</pallas_src>

<mosaic_0001>
module attributes {stable_mosaic.version = 11 : i64} {
  func.func @_layernorm_kernel(%arg0: i32, %arg1: memref<128x256xf32, #tpu.memory_space<vmem>>, %arg2: memref<1x256xf32, #tpu.memory_space<vmem>>, %arg3: memref<128x256xf32, #tpu.memory_space<vmem>>) attributes {dimension_semantics = [#tpu.dimension_semantics<parallel>], iteration_bounds = array<i64: 1>, scalar_prefetch = 0 : i64, scratch_operands = 0 : i64, tpu.core_type = #tpu.core_type<tc>, window_params = [{transform_indices = @transform_0, window_bounds = array<i64: 128, 256>}, {pipeline_mode = #tpu.pipeline_mode<synchronous>, transform_indices = @transform_1, window_bounds = array<i64: 1, 256>}, {transform_indices = @transform_2, window_bounds = array<i64: 128, 256>}]} {
    %c0 = arith.constant 0 : index
    %c0_0 = arith.constant 0 : index
    %0 = vector.load %arg1[%c0, %c0_0] : memref<128x256xf32, #tpu.memory_space<vmem>>, vector<128x256xf32>
    %cst = arith.constant dense<0.000000e+00> : vector<128xf32>
    %1 = vector.multi_reduction <add>, %0, %cst [1] : vector<128x256xf32> to vector<128xf32>
    %2 = vector.shape_cast %1 : vector<128xf32> to vector<128x1xf32>
    %3 = arith.mulf %0, %0 : vector<128x256xf32>
    %cst_1 = arith.constant dense<0.000000e+00> : vector<128xf32>
    %4 = vector.multi_reduction <add>, %3, %cst_1 [1] : vector<128x256xf32> to vector<128xf32>
    %5 = vector.shape_cast %4 : vector<128xf32> to vector<128x1xf32>
    %cst_2 = arith.constant 3.906250e-03 : f32
    %6 = vector.broadcast %cst_2 : f32 to vector<128x1xf32>
    %7 = arith.mulf %2, %6 : vector<128x1xf32>
    %8 = arith.mulf %2, %7 : vector<128x1xf32>
    %9 = arith.subf %5, %8 : vector<128x1xf32>
    %cst_3 = arith.constant 0.00392156886 : f32
    %10 = vector.broadcast %cst_3 : f32 to vector<128x1xf32>
    %11 = arith.mulf %9, %10 : vector<128x1xf32>
    %cst_4 = arith.constant 0.000000e+00 : f32
    %12 = vector.broadcast %cst_4 : f32 to vector<128x1xf32>
    %13 = arith.maximumf %11, %12 : vector<128x1xf32>
    %14 = math.sqrt %13 : vector<128x1xf32>
    %cst_5 = arith.constant 9.99999997E-7 : f32
    %15 = vector.broadcast %cst_5 : f32 to vector<128x1xf32>
    %16 = arith.addf %14, %15 : vector<128x1xf32>
    %17 = tpu.reciprocal %16 : vector<128x1xf32> -> vector<128x1xf32>
    %18 = vector.broadcast %7 : vector<128x1xf32> to vector<128x256xf32>
    %19 = arith.subf %0, %18 : vector<128x256xf32>
    %20 = vector.broadcast %17 : vector<128x1xf32> to vector<128x256xf32>
    %21 = arith.mulf %19, %20 : vector<128x256xf32>
    %c0_6 = arith.constant 0 : index
    %c0_7 = arith.constant 0 : index
    %22 = vector.load %arg2[%c0_6, %c0_7] : memref<1x256xf32, #tpu.memory_space<vmem>>, vector<1x256xf32>
    %23 = vector.broadcast %22 : vector<1x256xf32> to vector<128x256xf32>
    %24 = arith.addf %21, %23 : vector<128x256xf32>
    %c0_8 = arith.constant 0 : index
    %c0_9 = arith.constant 0 : index
    %25 = vector.load %arg3[%c0_8, %c0_9] : memref<128x256xf32, #tpu.memory_space<vmem>>, vector<128x256xf32>
    tpu.vector_store %arg3[%c0_8, %c0_9], %24 {strides = array<i32>} : memref<128x256xf32, #tpu.memory_space<vmem>>, vector<128x256xf32>,
    return
  }
  func.func @transform_0(%arg0: i32) -> (i32, i32) {
    %c0_i32 = arith.constant 0 : i32
    %c0_i32_0 = arith.constant 0 : i32
    return %arg0, %c0_i32 : i32, i32
  }
  func.func @transform_1(%arg0: i32) -> (i32, i32) {
    %c0_i32 = arith.constant 0 : i32
    %c0_i32_0 = arith.constant 0 : i32
    %c0_i32_1 = arith.constant 0 : i32
    return %c0_i32, %c0_i32_0 : i32, i32
  }
  func.func @transform_2(%arg0: i32) -> (i32, i32) {
    %c0_i32 = arith.constant 0 : i32
    %c0_i32_0 = arith.constant 0 : i32
    return %arg0, %c0_i32 : i32, i32
  }
}

</mosaic_0001>

<llo_original>
// kernel: tpu_custom_call.1
$region0: #{tpu_custom_call.1}
  #allocation0 [shape = 'u32[]', space=smem, size = 0x4, offset = 0x4, fixed_abs, tag = 'smem constant byte address 0x4 - core index']
  #allocation1 [shape = 'u32[144,128]{1,0:T(1,128)}', space=vmem, size = 0x12000, scoped, tag = 'internal scratch']
  %s0 = inlined_call_operand.hbm [shape: f32[128,256], index: 0, kind: input, shape index: {}]
  %s1 = inlined_call_operand.hbm [shape: f32[1,256], index: 1, kind: input, shape index: {}]
  %s2 = inlined_call_operand.hbm [shape: f32[128,256], index: 2, kind: output, shape index: {}]
  %s3 = sld [smem:[#allocation0]]
  $region26: #{tpu_custom_call.1} parent=0
    _
  %s5 = ssub.s32 1, %s3
  %s6 = scalar_select 0, %s5, %s3
  $region1: #{tpu_custom_call.1} parent=0
    #allocation2 [shape = 'u8[131072]{0}', space=vmem, size = 0x20000, scoped, tag = 'input window, operand 0, single buffered']
    #allocation3 [shape = 's32[1]{0}', space=sflag, size = 0x4, scoped, tag = 'scoped memory for tpu_custom_call.1']
    #allocation4 [shape = 's32[1]{0}', space=sflag, size = 0x4, scoped, tag = 'scoped memory for tpu_custom_call.1']
    #allocation5 [shape = 'u8[1024]{0}', space=vmem, size = 0x400, scoped, tag = 'input window, operand 1, single buffered']
    #allocation6 [shape = 's32[1]{0}', space=sflag, size = 0x4, scoped, tag = 'scoped memory for tpu_custom_call.1']
    #allocation7 [shape = 'u8[131072]{0}', space=vmem, size = 0x20000, scoped, tag = 'output window, operand 0, single buffered']
    %7 = vsyncpa [#allocation3], 0
    %8 = vsyncpa [#allocation6], 0
    %9 = vsyncpa [#allocation4], 0
    // Predicated region
    $region2: #{tpu_custom_call.1} parent=1 // pred_check
      _
    $region3: #{tpu_custom_call.1} parent=1 // pred_check_branch
      %11 = sbr.rel (0) target = $region5
    $region4: #{tpu_custom_call.1} parent=1 // pred_region
      %s13 = ssub.s32 4096, 4096
      %14 = vsyncadd [#allocation3], %s13
      %s15 = sshll.u32 [#allocation2], 4
      %s16 = int_to_ptr.vmem [resolvable:$true] %s15
      %21 = dma.hbm_to_vmem [thread:$0]  %s0, 4096, %s16, [#allocation3], 256, 256, 16
    $region5: #{tpu_custom_call.1} parent=1 // pred_fallthru
      _
    // Predicated region
    $region6: #{tpu_custom_call.1} parent=1 // pred_check
      _
    $region7: #{tpu_custom_call.1} parent=1 // pred_check_branch
      %23 = sbr.rel (0) target = $region9
    $region8: #{tpu_custom_call.1} parent=1 // pred_region
      %s25 = ssub.s32 32, 32
      %26 = vsyncadd [#allocation6], %s25
      %s28 = sshll.u32 [#allocation5], 4
      %s29 = int_to_ptr.vmem [resolvable:$true] %s28
      %31 = dma.hbm_to_vmem [thread:$0]  %s1, 32, %s29, [#allocation6]
    $region9: #{tpu_custom_call.1} parent=1 // pred_fallthru
      _
    // Predicated region
    $region10: #{tpu_custom_call.1} parent=1 // pred_check
      _
    $region11: #{tpu_custom_call.1} parent=1 // pred_check_branch
      %33 = sbr.rel (0) target = $region13
    $region12: #{tpu_custom_call.1} parent=1 // pred_region
      %34 = dma.done [#allocation3], 4096
    $region13: #{tpu_custom_call.1} parent=1 // pred_fallthru
      _
    // Predicated region
    $region14: #{tpu_custom_call.1} parent=1 // pred_check
      _
    $region15: #{tpu_custom_call.1} parent=1 // pred_check_branch
      %36 = sbr.rel (0) target = $region17
    $region16: #{tpu_custom_call.1} parent=1 // pred_region
      %37 = dma.done [#allocation6], 32
    $region17: #{tpu_custom_call.1} parent=1 // pred_fallthru
      _
    %v38 = vld [vmem:[#allocation2] sm:$0xff]
    %v39 = vld [vmem:[#allocation2 + $0x8] sm:$0xff]
    %v40 = vld [vmem:[#allocation2 + $0x10] sm:$0xff]
    %v41 = vld [vmem:[#allocation2 + $0x18] sm:$0xff]
    %v42 = vld [vmem:[#allocation2 + $0x20] sm:$0xff]
    %v43 = vld [vmem:[#allocation2 + $0x28] sm:$0xff]
    %v44 = vld [vmem:[#allocation2 + $0x30] sm:$0xff]
    %v45 = vld [vmem:[#allocation2 + $0x38] sm:$0xff]
    %v46 = vld [vmem:[#allocation2 + $0x40] sm:$0xff]
    %v47 = vld [vmem:[#allocation2 + $0x48] sm:$0xff]
    %v48 = vld [vmem:[#allocation2 + $0x50] sm:$0xff]
    %v49 = vld [vmem:[#allocation2 + $0x58] sm:$0xff]
    %v50 = vld [vmem:[#allocation2 + $0x60] sm:$0xff]
    %v51 = vld [vmem:[#allocation2 + $0x68] sm:$0xff]
    %v52 = vld [vmem:[#allocation2 + $0x70] sm:$0xff]
    %v53 = vld [vmem:[#allocation2 + $0x78] sm:$0xff]
    %v54 = vld [vmem:[#allocation2 + $0x80] sm:$0xff]
    %v55 = vld [vmem:[#allocation2 + $0x88] sm:$0xff]
    %v56 = vld [vmem:[#allocation2 + $0x90] sm:$0xff]
    %v57 = vld [vmem:[#allocation2 + $0x98] sm:$0xff]
    %v58 = vld [vmem:[#allocation2 + $0xa0] sm:$0xff]
    %v59 = vld [vmem:[#allocation2 + $0xa8] sm:$0xff]
    %v60 = vld [vmem:[#allocation2 + $0xb0] sm:$0xff]
    %v61 = vld [vmem:[#allocation2 + $0xb8] sm:$0xff]
    %v62 = vld [vmem:[#allocation2 + $0xc0] sm:$0xff]
    %v63 = vld [vmem:[#allocation2 + $0xc8] sm:$0xff]
    %v64 = vld [vmem:[#allocation2 + $0xd0] sm:$0xff]
    %v65 = vld [vmem:[#allocation2 + $0xd8] sm:$0xff]
    %v66 = vld [vmem:[#allocation2 + $0xe0] sm:$0xff]
    %v67 = vld [vmem:[#allocation2 + $0xe8] sm:$0xff]
    %v68 = vld [vmem:[#allocation2 + $0xf0] sm:$0xff]
    %v69 = vld [vmem:[#allocation2 + $0xf8] sm:$0xff]
    %v70 = vadd.f32 %v38, %v39
    %71 = vadd.xlane.f32.xlu0 %v70
    %v72 = vpop.xlane.xlu0 %71
    %v73 = vadd.f32 %v40, %v41
    %74 = vadd.xlane.f32.xlu0 %v73
    %v75 = vpop.xlane.xlu0 %74
    %v76 = vadd.f32 %v42, %v43
    %77 = vadd.xlane.f32.xlu0 %v76
    %v78 = vpop.xlane.xlu0 %77
    %v79 = vadd.f32 %v44, %v45
    %80 = vadd.xlane.f32.xlu0 %v79
    %v81 = vpop.xlane.xlu0 %80
    %v82 = vadd.f32 %v46, %v47
    %83 = vadd.xlane.f32.xlu0 %v82
    %v84 = vpop.xlane.xlu0 %83
    %v85 = vadd.f32 %v48, %v49
    %86 = vadd.xlane.f32.xlu0 %v85
    %v87 = vpop.xlane.xlu0 %86
    %v88 = vadd.f32 %v50, %v51
    %89 = vadd.xlane.f32.xlu0 %v88
    %v90 = vpop.xlane.xlu0 %89
    %v91 = vadd.f32 %v52, %v53
    %92 = vadd.xlane.f32.xlu0 %v91
    %v93 = vpop.xlane.xlu0 %92
    %v94 = vadd.f32 %v54, %v55
    %95 = vadd.xlane.f32.xlu0 %v94
    %v96 = vpop.xlane.xlu0 %95
    %v97 = vadd.f32 %v56, %v57
    %98 = vadd.xlane.f32.xlu0 %v97
    %v99 = vpop.xlane.xlu0 %98
    %v100 = vadd.f32 %v58, %v59
    %101 = vadd.xlane.f32.xlu0 %v100
    %v102 = vpop.xlane.xlu0 %101
    %v103 = vadd.f32 %v60, %v61
    %104 = vadd.xlane.f32.xlu0 %v103
    %v105 = vpop.xlane.xlu0 %104
    %v106 = vadd.f32 %v62, %v63
    %107 = vadd.xlane.f32.xlu0 %v106
    %v108 = vpop.xlane.xlu0 %107
    %v109 = vadd.f32 %v64, %v65
    %110 = vadd.xlane.f32.xlu0 %v109
    %v111 = vpop.xlane.xlu0 %110
    %v112 = vadd.f32 %v66, %v67
    %113 = vadd.xlane.f32.xlu0 %v112
    %v114 = vpop.xlane.xlu0 %113
    %v115 = vadd.f32 %v68, %v69
    %116 = vadd.xlane.f32.xlu0 %v115
    %v117 = vpop.xlane.xlu0 %116
    %v118 = vmul.f32 %v38, %v38
    %v119 = vmul.f32 %v39, %v39
    %v120 = vmul.f32 %v40, %v40
    %v121 = vmul.f32 %v41, %v41
    %v122 = vmul.f32 %v42, %v42
    %v123 = vmul.f32 %v43, %v43
    %v124 = vmul.f32 %v44, %v44
    %v125 = vmul.f32 %v45, %v45
    %v126 = vmul.f32 %v46, %v46
    %v127 = vmul.f32 %v47, %v47
    %v128 = vmul.f32 %v48, %v48
    %v129 = vmul.f32 %v49, %v49
    %v130 = vmul.f32 %v50, %v50
    %v131 = vmul.f32 %v51, %v51
    %v132 = vmul.f32 %v52, %v52
    %v133 = vmul.f32 %v53, %v53
    %v134 = vmul.f32 %v54, %v54
    %v135 = vmul.f32 %v55, %v55
    %v136 = vmul.f32 %v56, %v56
    %v137 = vmul.f32 %v57, %v57
    %v138 = vmul.f32 %v58, %v58
    %v139 = vmul.f32 %v59, %v59
    %v140 = vmul.f32 %v60, %v60
    %v141 = vmul.f32 %v61, %v61
    %v142 = vmul.f32 %v62, %v62
    %v143 = vmul.f32 %v63, %v63
    %v144 = vmul.f32 %v64, %v64
    %v145 = vmul.f32 %v65, %v65
    %v146 = vmul.f32 %v66, %v66
    %v147 = vmul.f32 %v67, %v67
    %v148 = vmul.f32 %v68, %v68
    %v149 = vmul.f32 %v69, %v69
    %v150 = vadd.f32 %v118, %v119
    %151 = vadd.xlane.f32.xlu0 %v150
    %v152 = vpop.xlane.xlu0 %151
    %v153 = vadd.f32 %v120, %v121
    %154 = vadd.xlane.f32.xlu0 %v153
    %v155 = vpop.xlane.xlu0 %154
    %v156 = vadd.f32 %v122, %v123
    %157 = vadd.xlane.f32.xlu0 %v156
    %v158 = vpop.xlane.xlu0 %157
    %v159 = vadd.f32 %v124, %v125
    %160 = vadd.xlane.f32.xlu0 %v159
    %v161 = vpop.xlane.xlu0 %160
    %v162 = vadd.f32 %v126, %v127
    %163 = vadd.xlane.f32.xlu0 %v162
    %v164 = vpop.xlane.xlu0 %163
    %v165 = vadd.f32 %v128, %v129
    %166 = vadd.xlane.f32.xlu0 %v165
    %v167 = vpop.xlane.xlu0 %166
    %v168 = vadd.f32 %v130, %v131
    %169 = vadd.xlane.f32.xlu0 %v168
    %v170 = vpop.xlane.xlu0 %169
    %v171 = vadd.f32 %v132, %v133
    %172 = vadd.xlane.f32.xlu0 %v171
    %v173 = vpop.xlane.xlu0 %172
    %v174 = vadd.f32 %v134, %v135
    %175 = vadd.xlane.f32.xlu0 %v174
    %v176 = vpop.xlane.xlu0 %175
    %v177 = vadd.f32 %v136, %v137
    %178 = vadd.xlane.f32.xlu0 %v177
    %v179 = vpop.xlane.xlu0 %178
    %v180 = vadd.f32 %v138, %v139
    %181 = vadd.xlane.f32.xlu0 %v180
    %v182 = vpop.xlane.xlu0 %181
    %v183 = vadd.f32 %v140, %v141
    %184 = vadd.xlane.f32.xlu0 %v183
    %v185 = vpop.xlane.xlu0 %184
    %v186 = vadd.f32 %v142, %v143
    %187 = vadd.xlane.f32.xlu0 %v186
    %v188 = vpop.xlane.xlu0 %187
    %v189 = vadd.f32 %v144, %v145
    %190 = vadd.xlane.f32.xlu0 %v189
    %v191 = vpop.xlane.xlu0 %190
    %v192 = vadd.f32 %v146, %v147
    %193 = vadd.xlane.f32.xlu0 %v192
    %v194 = vpop.xlane.xlu0 %193
    %v195 = vadd.f32 %v148, %v149
    %196 = vadd.xlane.f32.xlu0 %v195
    %v197 = vpop.xlane.xlu0 %196
    %v198 = vmul.f32 %v72, 0.00390625
    %v199 = vmul.f32 %v75, 0.00390625
    %v200 = vmul.f32 %v78, 0.00390625
    %v201 = vmul.f32 %v81, 0.00390625
    %v202 = vmul.f32 %v84, 0.00390625
    %v203 = vmul.f32 %v87, 0.00390625
    %v204 = vmul.f32 %v90, 0.00390625
    %v205 = vmul.f32 %v93, 0.00390625
    %v206 = vmul.f32 %v96, 0.00390625
    %v207 = vmul.f32 %v99, 0.00390625
    %v208 = vmul.f32 %v102, 0.00390625
    %v209 = vmul.f32 %v105, 0.00390625
    %v210 = vmul.f32 %v108, 0.00390625
    %v211 = vmul.f32 %v111, 0.00390625
    %v212 = vmul.f32 %v114, 0.00390625
    %v213 = vmul.f32 %v117, 0.00390625
    %v214 = vmul.f32 %v72, %v198
    %v215 = vmul.f32 %v75, %v199
    %v216 = vmul.f32 %v78, %v200
    %v217 = vmul.f32 %v81, %v201
    %v218 = vmul.f32 %v84, %v202
    %v219 = vmul.f32 %v87, %v203
    %v220 = vmul.f32 %v90, %v204
    %v221 = vmul.f32 %v93, %v205
    %v222 = vmul.f32 %v96, %v206
    %v223 = vmul.f32 %v99, %v207
    %v224 = vmul.f32 %v102, %v208
    %v225 = vmul.f32 %v105, %v209
    %v226 = vmul.f32 %v108, %v210
    %v227 = vmul.f32 %v111, %v211
    %v228 = vmul.f32 %v114, %v212
    %v229 = vmul.f32 %v117, %v213
    %v230 = vsub.f32 %v152, %v214
    %v231 = vsub.f32 %v155, %v215
    %v232 = vsub.f32 %v158, %v216
    %v233 = vsub.f32 %v161, %v217
    %v234 = vsub.f32 %v164, %v218
    %v235 = vsub.f32 %v167, %v219
    %v236 = vsub.f32 %v170, %v220
    %v237 = vsub.f32 %v173, %v221
    %v238 = vsub.f32 %v176, %v222
    %v239 = vsub.f32 %v179, %v223
    %v240 = vsub.f32 %v182, %v224
    %v241 = vsub.f32 %v185, %v225
    %v242 = vsub.f32 %v188, %v226
    %v243 = vsub.f32 %v191, %v227
    %v244 = vsub.f32 %v194, %v228
    %v245 = vsub.f32 %v197, %v229
    %v246 = vmul.f32 %v230, 0.003921569
    %v247 = vmul.f32 %v231, 0.003921569
    %v248 = vmul.f32 %v232, 0.003921569
    %v249 = vmul.f32 %v233, 0.003921569
    %v250 = vmul.f32 %v234, 0.003921569
    %v251 = vmul.f32 %v235, 0.003921569
    %v252 = vmul.f32 %v236, 0.003921569
    %v253 = vmul.f32 %v237, 0.003921569
    %v254 = vmul.f32 %v238, 0.003921569
    %v255 = vmul.f32 %v239, 0.003921569
    %v256 = vmul.f32 %v240, 0.003921569
    %v257 = vmul.f32 %v241, 0.003921569
    %v258 = vmul.f32 %v242, 0.003921569
    %v259 = vmul.f32 %v243, 0.003921569
    %v260 = vmul.f32 %v244, 0.003921569
    %v261 = vmul.f32 %v245, 0.003921569
    %v262 = vmax.f32 %v246, 0.0
    %v263 = vmax.f32 %v247, 0.0
    %v264 = vmax.f32 %v248, 0.0
    %v265 = vmax.f32 %v249, 0.0
    %v266 = vmax.f32 %v250, 0.0
    %v267 = vmax.f32 %v251, 0.0
    %v268 = vmax.f32 %v252, 0.0
    %v269 = vmax.f32 %v253, 0.0
    %v270 = vmax.f32 %v254, 0.0
    %v271 = vmax.f32 %v255, 0.0
    %v272 = vmax.f32 %v256, 0.0
    %v273 = vmax.f32 %v257, 0.0
    %v274 = vmax.f32 %v258, 0.0
    %v275 = vmax.f32 %v259, 0.0
    %v276 = vmax.f32 %v260, 0.0
    %v277 = vmax.f32 %v261, 0.0
    %v278 = vrsqrt.pop %v262
    %v279 = vmul.f32 %v262, %v278
    %vm280 = vcmp.eq.f32.partialorder %v262, inf
    %v281 = vsel %vm280, %v262, %v279
    %vm282 = vcmp.eq.f32.partialorder %v262, 0.0
    %v283 = vand.u32 %v262, 2147483648
    %v284 = vsel %vm282, %v283, %v281
    %v285 = vrsqrt.pop %v263
    %v286 = vmul.f32 %v263, %v285
    %vm287 = vcmp.eq.f32.partialorder %v263, inf
    %v288 = vsel %vm287, %v263, %v286
    %vm289 = vcmp.eq.f32.partialorder %v263, 0.0
    %v290 = vand.u32 %v263, 2147483648
    %v291 = vsel %vm289, %v290, %v288
    %v292 = vrsqrt.pop %v264
    %v293 = vmul.f32 %v264, %v292
    %vm294 = vcmp.eq.f32.partialorder %v264, inf
    %v295 = vsel %vm294, %v264, %v293
    %vm296 = vcmp.eq.f32.partialorder %v264, 0.0
    %v297 = vand.u32 %v264, 2147483648
    %v298 = vsel %vm296, %v297, %v295
    %v299 = vrsqrt.pop %v265
    %v300 = vmul.f32 %v265, %v299
    %vm301 = vcmp.eq.f32.partialorder %v265, inf
    %v302 = vsel %vm301, %v265, %v300
    %vm303 = vcmp.eq.f32.partialorder %v265, 0.0
    %v304 = vand.u32 %v265, 2147483648
    %v305 = vsel %vm303, %v304, %v302
    %v306 = vrsqrt.pop %v266
    %v307 = vmul.f32 %v266, %v306
    %vm308 = vcmp.eq.f32.partialorder %v266, inf
    %v309 = vsel %vm308, %v266, %v307
    %vm310 = vcmp.eq.f32.partialorder %v266, 0.0
    %v311 = vand.u32 %v266, 2147483648
    %v312 = vsel %vm310, %v311, %v309
    %v313 = vrsqrt.pop %v267
    %v314 = vmul.f32 %v267, %v313
    %vm315 = vcmp.eq.f32.partialorder %v267, inf
    %v316 = vsel %vm315, %v267, %v314
    %vm317 = vcmp.eq.f32.partialorder %v267, 0.0
    %v318 = vand.u32 %v267, 2147483648
    %v319 = vsel %vm317, %v318, %v316
    %v320 = vrsqrt.pop %v268
    %v321 = vmul.f32 %v268, %v320
    %vm322 = vcmp.eq.f32.partialorder %v268, inf
    %v323 = vsel %vm322, %v268, %v321
    %vm324 = vcmp.eq.f32.partialorder %v268, 0.0
    %v325 = vand.u32 %v268, 2147483648
    %v326 = vsel %vm324, %v325, %v323
    %v327 = vrsqrt.pop %v269
    %v328 = vmul.f32 %v269, %v327
    %vm329 = vcmp.eq.f32.partialorder %v269, inf
    %v330 = vsel %vm329, %v269, %v328
    %vm331 = vcmp.eq.f32.partialorder %v269, 0.0
    %v332 = vand.u32 %v269, 2147483648
    %v333 = vsel %vm331, %v332, %v330
    %v334 = vrsqrt.pop %v270
    %v335 = vmul.f32 %v270, %v334
    %vm336 = vcmp.eq.f32.partialorder %v270, inf
    %v337 = vsel %vm336, %v270, %v335
    %vm338 = vcmp.eq.f32.partialorder %v270, 0.0
    %v339 = vand.u32 %v270, 2147483648
    %v340 = vsel %vm338, %v339, %v337
    %v341 = vrsqrt.pop %v271
    %v342 = vmul.f32 %v271, %v341
    %vm343 = vcmp.eq.f32.partialorder %v271, inf
    %v344 = vsel %vm343, %v271, %v342
    %vm345 = vcmp.eq.f32.partialorder %v271, 0.0
    %v346 = vand.u32 %v271, 2147483648
    %v347 = vsel %vm345, %v346, %v344
    %v348 = vrsqrt.pop %v272
    %v349 = vmul.f32 %v272, %v348
    %vm350 = vcmp.eq.f32.partialorder %v272, inf
    %v351 = vsel %vm350, %v272, %v349
    %vm352 = vcmp.eq.f32.partialorder %v272, 0.0
    %v353 = vand.u32 %v272, 2147483648
    %v354 = vsel %vm352, %v353, %v351
    %v355 = vrsqrt.pop %v273
    %v356 = vmul.f32 %v273, %v355
    %vm357 = vcmp.eq.f32.partialorder %v273, inf
    %v358 = vsel %vm357, %v273, %v356
    %vm359 = vcmp.eq.f32.partialorder %v273, 0.0
    %v360 = vand.u32 %v273, 2147483648
    %v361 = vsel %vm359, %v360, %v358
    %v362 = vrsqrt.pop %v274
    %v363 = vmul.f32 %v274, %v362
    %vm364 = vcmp.eq.f32.partialorder %v274, inf
    %v365 = vsel %vm364, %v274, %v363
    %vm366 = vcmp.eq.f32.partialorder %v274, 0.0
    %v367 = vand.u32 %v274, 2147483648
    %v368 = vsel %vm366, %v367, %v365
    %v369 = vrsqrt.pop %v275
    %v370 = vmul.f32 %v275, %v369
    %vm371 = vcmp.eq.f32.partialorder %v275, inf
    %v372 = vsel %vm371, %v275, %v370
    %vm373 = vcmp.eq.f32.partialorder %v275, 0.0
    %v374 = vand.u32 %v275, 2147483648
    %v375 = vsel %vm373, %v374, %v372
    %v376 = vrsqrt.pop %v276
    %v377 = vmul.f32 %v276, %v376
    %vm378 = vcmp.eq.f32.partialorder %v276, inf
    %v379 = vsel %vm378, %v276, %v377
    %vm380 = vcmp.eq.f32.partialorder %v276, 0.0
    %v381 = vand.u32 %v276, 2147483648
    %v382 = vsel %vm380, %v381, %v379
    %v383 = vrsqrt.pop %v277
    %v384 = vmul.f32 %v277, %v383
    %vm385 = vcmp.eq.f32.partialorder %v277, inf
    %v386 = vsel %vm385, %v277, %v384
    %vm387 = vcmp.eq.f32.partialorder %v277, 0.0
    %v388 = vand.u32 %v277, 2147483648
    %v389 = vsel %vm387, %v388, %v386
    %v390 = vadd.f32 %v284, 1e-06
    %v391 = vadd.f32 %v291, 1e-06
    %v392 = vadd.f32 %v298, 1e-06
    %v393 = vadd.f32 %v305, 1e-06
    %v394 = vadd.f32 %v312, 1e-06
    %v395 = vadd.f32 %v319, 1e-06
    %v396 = vadd.f32 %v326, 1e-06
    %v397 = vadd.f32 %v333, 1e-06
    %v398 = vadd.f32 %v340, 1e-06
    %v399 = vadd.f32 %v347, 1e-06
    %v400 = vadd.f32 %v354, 1e-06
    %v401 = vadd.f32 %v361, 1e-06
    %v402 = vadd.f32 %v368, 1e-06
    %v403 = vadd.f32 %v375, 1e-06
    %v404 = vadd.f32 %v382, 1e-06
    %v405 = vadd.f32 %v389, 1e-06
    %v406 = vrcp.pop %v390
    %v407 = vrcp.pop %v391
    %v408 = vrcp.pop %v392
    %v409 = vrcp.pop %v393
    %v410 = vrcp.pop %v394
    %v411 = vrcp.pop %v395
    %v412 = vrcp.pop %v396
    %v413 = vrcp.pop %v397
    %v414 = vrcp.pop %v398
    %v415 = vrcp.pop %v399
    %v416 = vrcp.pop %v400
    %v417 = vrcp.pop %v401
    %v418 = vrcp.pop %v402
    %v419 = vrcp.pop %v403
    %v420 = vrcp.pop %v404
    %v421 = vrcp.pop %v405
    %v422 = vsub.f32 %v38, %v198
    %v423 = vsub.f32 %v39, %v198
    %v424 = vsub.f32 %v40, %v199
    %v425 = vsub.f32 %v41, %v199
    %v426 = vsub.f32 %v42, %v200
    %v427 = vsub.f32 %v43, %v200
    %v428 = vsub.f32 %v44, %v201
    %v429 = vsub.f32 %v45, %v201
    %v430 = vsub.f32 %v46, %v202
    %v431 = vsub.f32 %v47, %v202
    %v432 = vsub.f32 %v48, %v203
    %v433 = vsub.f32 %v49, %v203
    %v434 = vsub.f32 %v50, %v204
    %v435 = vsub.f32 %v51, %v204
    %v436 = vsub.f32 %v52, %v205
    %v437 = vsub.f32 %v53, %v205
    %v438 = vsub.f32 %v54, %v206
    %v439 = vsub.f32 %v55, %v206
    %v440 = vsub.f32 %v56, %v207
    %v441 = vsub.f32 %v57, %v207
    %v442 = vsub.f32 %v58, %v208
    %v443 = vsub.f32 %v59, %v208
    %v444 = vsub.f32 %v60, %v209
    %v445 = vsub.f32 %v61, %v209
    %v446 = vsub.f32 %v62, %v210
    %v447 = vsub.f32 %v63, %v210
    %v448 = vsub.f32 %v64, %v211
    %v449 = vsub.f32 %v65, %v211
    %v450 = vsub.f32 %v66, %v212
    %v451 = vsub.f32 %v67, %v212
    %v452 = vsub.f32 %v68, %v213
    %v453 = vsub.f32 %v69, %v213
    %v454 = vmul.f32 %v422, %v406
    %v455 = vmul.f32 %v423, %v406
    %v456 = vmul.f32 %v424, %v407
    %v457 = vmul.f32 %v425, %v407
    %v458 = vmul.f32 %v426, %v408
    %v459 = vmul.f32 %v427, %v408
    %v460 = vmul.f32 %v428, %v409
    %v461 = vmul.f32 %v429, %v409
    %v462 = vmul.f32 %v430, %v410
    %v463 = vmul.f32 %v431, %v410
    %v464 = vmul.f32 %v432, %v411
    %v465 = vmul.f32 %v433, %v411
    %v466 = vmul.f32 %v434, %v412
    %v467 = vmul.f32 %v435, %v412
    %v468 = vmul.f32 %v436, %v413
    %v469 = vmul.f32 %v437, %v413
    %v470 = vmul.f32 %v438, %v414
    %v471 = vmul.f32 %v439, %v414
    %v472 = vmul.f32 %v440, %v415
    %v473 = vmul.f32 %v441, %v415
    %v474 = vmul.f32 %v442, %v416
    %v475 = vmul.f32 %v443, %v416
    %v476 = vmul.f32 %v444, %v417
    %v477 = vmul.f32 %v445, %v417
    %v478 = vmul.f32 %v446, %v418
    %v479 = vmul.f32 %v447, %v418
    %v480 = vmul.f32 %v448, %v419
    %v481 = vmul.f32 %v449, %v419
    %v482 = vmul.f32 %v450, %v420
    %v483 = vmul.f32 %v451, %v420
    %v484 = vmul.f32 %v452, %v421
    %v485 = vmul.f32 %v453, %v421
    %v486 = vld [vmem:[#allocation5] sm:$0x3]
    %v488 = vlaneseq
    %v489 = vshrl.u32 %v488, 7
    %v490 = vsub.s32 0, %v489
    %v491 = vrot.slane %v486, %v490
    %v492 = vlaneseq
    %v493 = vshrl.u32 %v492, 7
    %v494 = vsub.s32 1, %v493
    %v495 = vrot.slane %v486, %v494
    %v498 = vadd.f32 %v454, %v491
    %v499 = vadd.f32 %v455, %v495
    %v500 = vadd.f32 %v456, %v491
    %v501 = vadd.f32 %v457, %v495
    %v502 = vadd.f32 %v458, %v491
    %v503 = vadd.f32 %v459, %v495
    %v504 = vadd.f32 %v460, %v491
    %v505 = vadd.f32 %v461, %v495
    %v506 = vadd.f32 %v462, %v491
    %v507 = vadd.f32 %v463, %v495
    %v508 = vadd.f32 %v464, %v491
    %v509 = vadd.f32 %v465, %v495
    %v510 = vadd.f32 %v466, %v491
    %v511 = vadd.f32 %v467, %v495
    %v512 = vadd.f32 %v468, %v491
    %v513 = vadd.f32 %v469, %v495
    %v514 = vadd.f32 %v470, %v491
    %v515 = vadd.f32 %v471, %v495
    %v516 = vadd.f32 %v472, %v491
    %v517 = vadd.f32 %v473, %v495
    %v518 = vadd.f32 %v474, %v491
    %v519 = vadd.f32 %v475, %v495
    %v520 = vadd.f32 %v476, %v491
    %v521 = vadd.f32 %v477, %v495
    %v522 = vadd.f32 %v478, %v491
    %v523 = vadd.f32 %v479, %v495
    %v524 = vadd.f32 %v480, %v491
    %v525 = vadd.f32 %v481, %v495
    %v526 = vadd.f32 %v482, %v491
    %v527 = vadd.f32 %v483, %v495
    %v528 = vadd.f32 %v484, %v491
    %v529 = vadd.f32 %v485, %v495
    %530 = vst [vmem:[#allocation7] sm:$0xff] %v498
    %531 = vst [vmem:[#allocation7 + $0x8] sm:$0xff] %v499
    %532 = vst [vmem:[#allocation7 + $0x10] sm:$0xff] %v500
    %533 = vst [vmem:[#allocation7 + $0x18] sm:$0xff] %v501
    %534 = vst [vmem:[#allocation7 + $0x20] sm:$0xff] %v502
    %535 = vst [vmem:[#allocation7 + $0x28] sm:$0xff] %v503
    %536 = vst [vmem:[#allocation7 + $0x30] sm:$0xff] %v504
    %537 = vst [vmem:[#allocation7 + $0x38] sm:$0xff] %v505
    %538 = vst [vmem:[#allocation7 + $0x40] sm:$0xff] %v506
    %539 = vst [vmem:[#allocation7 + $0x48] sm:$0xff] %v507
    %540 = vst [vmem:[#allocation7 + $0x50] sm:$0xff] %v508
    %541 = vst [vmem:[#allocation7 + $0x58] sm:$0xff] %v509
    %542 = vst [vmem:[#allocation7 + $0x60] sm:$0xff] %v510
    %543 = vst [vmem:[#allocation7 + $0x68] sm:$0xff] %v511
    %544 = vst [vmem:[#allocation7 + $0x70] sm:$0xff] %v512
    %545 = vst [vmem:[#allocation7 + $0x78] sm:$0xff] %v513
    %546 = vst [vmem:[#allocation7 + $0x80] sm:$0xff] %v514
    %547 = vst [vmem:[#allocation7 + $0x88] sm:$0xff] %v515
    %548 = vst [vmem:[#allocation7 + $0x90] sm:$0xff] %v516
    %549 = vst [vmem:[#allocation7 + $0x98] sm:$0xff] %v517
    %550 = vst [vmem:[#allocation7 + $0xa0] sm:$0xff] %v518
    %551 = vst [vmem:[#allocation7 + $0xa8] sm:$0xff] %v519
    %552 = vst [vmem:[#allocation7 + $0xb0] sm:$0xff] %v520
    %553 = vst [vmem:[#allocation7 + $0xb8] sm:$0xff] %v521
    %554 = vst [vmem:[#allocation7 + $0xc0] sm:$0xff] %v522
    %555 = vst [vmem:[#allocation7 + $0xc8] sm:$0xff] %v523
    %556 = vst [vmem:[#allocation7 + $0xd0] sm:$0xff] %v524
    %557 = vst [vmem:[#allocation7 + $0xd8] sm:$0xff] %v525
    %558 = vst [vmem:[#allocation7 + $0xe0] sm:$0xff] %v526
    %559 = vst [vmem:[#allocation7 + $0xe8] sm:$0xff] %v527
    %560 = vst [vmem:[#allocation7 + $0xf0] sm:$0xff] %v528
    %561 = vst [vmem:[#allocation7 + $0xf8] sm:$0xff] %v529
    // Predicated region
    $region18: #{tpu_custom_call.1} parent=1 // pred_check
      _
    $region19: #{tpu_custom_call.1} parent=1 // pred_check_branch
      %563 = sbr.rel (0) target = $region21
    $region20: #{tpu_custom_call.1} parent=1 // pred_region
      %s565 = ssub.s32 4096, 4096
      %566 = vsyncadd [#allocation4], %s565
      %s567 = sshll.u32 [#allocation7], 4
      %s568 = int_to_ptr.vmem [resolvable:$true] %s567
      %573 = dma.vmem_to_hbm [thread:$0]  %s568, 4096, %s2, [#allocation4], 256, 256, 16
    $region21: #{tpu_custom_call.1} parent=1 // pred_fallthru
      _
    // Predicated region
    $region22: #{tpu_custom_call.1} parent=1 // pred_check
      _
    $region23: #{tpu_custom_call.1} parent=1 // pred_check_branch
      %575 = sbr.rel (0) target = $region25
    $region24: #{tpu_custom_call.1} parent=1 // pred_region
      %576 = dma.done [#allocation4], 4096
    $region25: #{tpu_custom_call.1} parent=1 // pred_fallthru
      _
    %577 = vsyncpa [#allocation3], 1
    %578 = vsyncpa [#allocation6], 1
    %579 = vsyncpa [#allocation4], 1

</llo_original>
